<compile_context>
chip_gen: v5e
topology: v5e:2x2
jax: 0.10.0
libtpu: 0.0.40
codegen_flags: <defaults>
</compile_context>

<pallas_src>
import jax
import jax.numpy as jnp
from jax.experimental import pallas as pl
from jax.experimental.pallas import tpu as pltpu

_NEG_INF = -1e30


def _round_up(a, m):
    return (a + m - 1) // m * m


def _cdiv(a, b):
    return (a + b - 1) // b


def _vmem_capacity_bytes():
    """Physical VMEM per generation (v5e/v6e: 128 MiB, v7x: 64 MiB)."""
    try:
        info = pltpu.get_tpu_info()
        for name in ("vmem_capacity_bytes", "vmem_size_bytes", "vmem_bytes"):
            cap = getattr(info, name, None)
            if cap:
                return int(cap)
    except Exception:
        pass
    return 64 << 20  # conservative fallback = smallest (v7x)


def belief_kernel(x_ref, w1_ref, b1_ref, wh_ref, bh_ref, logpi_ref, prob_ref):
    # Cast x to bf16 in-kernel (cheap VPU op, hidden under the MXU) instead of a
    # separate wrapper-side cast that re-reads/re-writes x in HBM.
    x = x_ref[...].astype(jnp.bfloat16)

    # h = relu(x @ W1 + b1); bf16 operands, f32 accumulation on the MXU.
    h = jnp.dot(x, w1_ref[...], preferred_element_type=jnp.float32)
    h = jnp.maximum(h + b1_ref[...], 0.0)

    # Fused heads: one (TM, Hp) @ (Hp, 2*dp) matmul for sample + prob heads.
    combined = jnp.dot(h.astype(wh_ref.dtype), wh_ref[...],
                       preferred_element_type=jnp.float32) + bh_ref[...]

    dp = logpi_ref.shape[-1]
    logits = combined[:, :dp]  # sample-head logits (padded cols carry bias -1e30)

    # log-softmax along features, all in f32.
    # INVARIANT: padded sample columns rely on the -1e30 bias underflowing to
    # exactly 0 in an f32 exp(); keep this path in f32.
    m = jnp.max(logits, axis=1, keepdims=True)
    lse = m + jnp.log(jnp.sum(jnp.exp(logits - m), axis=1, keepdims=True))
    logpi_ref[...] = (logits - lse).astype(logpi_ref.dtype)

    # prob head (no activation); padded columns are exactly 0 and sliced off later.
    prob_ref[...] = combined[:, dp:].astype(prob_ref.dtype)


def prepare_params(w1, b1, ws, bs, wp, bp):
    """One-time glue (NOT per forward call): transpose torch-layout (out, in)
    weights to (in, out), zero-pad the hidden dim to a lane multiple, pad the
    head dim to a multiple of 128, fuse both heads into one weight matrix, and
    cast matmul weights to bf16."""
    hidden_dim, input_dim = w1.shape
    d = ws.shape[0]
    dp = _round_up(d, 128)
    # Hidden dim padded so the first matmul's output is lane-dense and the second
    # matmul's contraction fills the MXU (256-multiples for the v6e/v7x MXU when
    # the model is big enough to warrant it).  Padded units are mathematically free.
    hp = _round_up(hidden_dim, 256) if hidden_dim > 128 else _round_up(hidden_dim, 128)

    w1_t = jnp.zeros((input_dim, hp), jnp.float32).at[:, :hidden_dim].set(
        jnp.asarray(w1, jnp.float32).T).astype(jnp.bfloat16)            # (K, Hp)
    b1_2d = jnp.zeros((1, hp), jnp.float32).at[:, :hidden_dim].set(
        jnp.asarray(b1, jnp.float32))                                   # (1, Hp)

    ws_p = jnp.zeros((hp, dp), jnp.float32).at[:hidden_dim, :d].set(
        jnp.asarray(ws, jnp.float32).T)
    wp_p = jnp.zeros((hp, dp), jnp.float32).at[:hidden_dim, :d].set(
        jnp.asarray(wp, jnp.float32).T)
    wh = jnp.concatenate([ws_p, wp_p], axis=1).astype(jnp.bfloat16)     # (Hp, 2*dp)

    bs_p = jnp.full((dp,), _NEG_INF, jnp.float32).at[:d].set(
        jnp.asarray(bs, jnp.float32))
    bp_p = jnp.zeros((dp,), jnp.float32).at[:d].set(jnp.asarray(bp, jnp.float32))
    bh = jnp.concatenate([bs_p, bp_p]).reshape(1, 2 * dp)               # (1, 2*dp)

    params = (w1_t, b1_2d, wh, bh)
    dims = dict(input_dim=input_dim, hidden_dim=hp, d=d, dp=dp)
    return params, dims


def belief_forward(x, params, dims, *, tm=512, out_dtype=jnp.float32):
    """Forward pass equivalent to Model.forward. Returns dict(logpi, true_prob).

    out_dtype=jnp.bfloat16 halves the dominant output write-back traffic at large
    batch if the caller tolerates bf16 results (default f32 matches the module).
    """
    w1_t, b1_2d, wh, bh = params
    K, Hp, d, dp = dims["input_dim"], dims["hidden_dim"], dims["d"], dims["dp"]
    B = x.shape[0]

    # Batch tile: multiple of 16 sublanes; larger tiles amortize the ~0.35us
    # per-grid-step overhead (sweep up to 1024 on v5e/v6e where VMEM allows).
    TM = max(16, min(_round_up(tm, 16), _round_up(B, 16)))
    # Guarantee >= 2 tiles for large batches so the "parallel" axis can shard
    # across v7x's two TensorCores (harmless on 1-TC v5e/v6e: tiles stay >=256).
    if B >= 512 and _cdiv(B, TM) < 2:
        TM = _round_up(_cdiv(B, 2), 16)
    nb = _cdiv(B, TM)  # partial last tile is masked by Pallas (no jnp.pad on x)

    x_bytes = jnp.dtype(x.dtype).itemsize
    out_bytes = jnp.dtype(out_dtype).itemsize

    # Resident weights counted once: correct because their index_maps are constant.
    cost = pl.CostEstimate(
        flops=2 * B * K * Hp + 2 * B * Hp * (2 * dp),
        transcendentals=B * (dp + 1),
        bytes_accessed=(B * K * x_bytes
                        + K * Hp * 2 + Hp * 4
                        + Hp * 2 * dp * 2 + 2 * dp * 4
                        + 2 * B * dp * out_bytes),
    )

    vmem_cap = _vmem_capacity_bytes()

    def run(single_buffer_weights):
        resident_kwargs = (
            dict(pipeline_mode=pl.Buffered(1)) if single_buffer_weights else {})
        weight_bufs = 1 if single_buffer_weights else 2

        # VMEM budget: resident weights/biases (single-buffered when supported)
        # + double-buffered streaming x/out tiles + intermediates, ~30% headroom,
        # clamped to ~85% of this generation's physical VMEM.
        resident = weight_bufs * (K * Hp * 2 + Hp * 2 * dp * 2 + Hp * 4 + 2 * dp * 4)
        per_step = TM * K * x_bytes + 2 * TM * dp * out_bytes
        scratch = TM * Hp * 4 + 3 * TM * dp * 4
        vmem_limit = int(min(0.85 * vmem_cap,
                             max(4 << 20,
                                 1.3 * (resident + 2 * per_step + scratch))))

        return pl.pallas_call(
            belief_kernel,
            out_shape=(
                jax.ShapeDtypeStruct((B, dp), out_dtype),
                jax.ShapeDtypeStruct((B, dp), out_dtype),
            ),
            grid=(nb,),
            in_specs=[
                pl.BlockSpec((TM, K), lambda i: (i, 0)),           # x streams over batch
                pl.BlockSpec((K, Hp), lambda i: (0, 0), **resident_kwargs),
                pl.BlockSpec((1, Hp), lambda i: (0, 0), **resident_kwargs),
                pl.BlockSpec((Hp, 2 * dp), lambda i: (0, 0), **resident_kwargs),
                pl.BlockSpec((1, 2 * dp), lambda i: (0, 0), **resident_kwargs),
            ],
            out_specs=(
                pl.BlockSpec((TM, dp), lambda i: (i, 0)),
                pl.BlockSpec((TM, dp), lambda i: (i, 0)),
            ),
            compiler_params=pltpu.CompilerParams(
                dimension_semantics=("parallel",),
                vmem_limit_bytes=vmem_limit,
            ),
            cost_estimate=cost,
        )(x, w1_t, b1_2d, wh, bh)

    try:
        logpi_p, prob_p = run(single_buffer_weights=True)
    except Exception:
        # Fallback if this JAX build rejects pipeline_mode=pl.Buffered(1) on the
        # resident operands; everything else stays identical.
        logpi_p, prob_p = run(single_buffer_weights=False)

    return dict(logpi=logpi_p[:, :d], true_prob=prob_p[:, :d])


def init_params(key, input_dim, hidden_dim, d):
    """Deterministic init mimicking nn.Linear default (uniform +/- 1/sqrt(fan_in)),
    in torch layout (out_features, in_features)."""
    k1, k2, k3, k4, k5, k6 = jax.random.split(key, 6)
    bound1 = 1.0 / jnp.sqrt(input_dim)
    bound2 = 1.0 / jnp.sqrt(hidden_dim)
    w1 = jax.random.uniform(k1, (hidden_dim, input_dim), jnp.float32, -bound1, bound1)
    b1 = jax.random.uniform(k2, (hidden_dim,), jnp.float32, -bound1, bound1)
    ws = jax.random.uniform(k3, (d, hidden_dim), jnp.float32, -bound2, bound2)
    bs = jax.random.uniform(k4, (d,), jnp.float32, -bound2, bound2)
    wp = jax.random.uniform(k5, (d, hidden_dim), jnp.float32, -bound2, bound2)
    bp = jax.random.uniform(k6, (d,), jnp.float32, -bound2, bound2)
    return w1, b1, ws, bs, wp, bp


if __name__ == "__main__":
    input_dim = 2
    hidden_dim = 2
    d = 4
    batch = 2

    key = jax.random.PRNGKey(0)
    kx, kp = jax.random.split(key)
    x = jax.random.normal(kx, (batch, input_dim), jnp.float32)
    w1, b1, ws, bs, wp, bp = init_params(kp, input_dim, hidden_dim, d)

    # One-time weight preparation (transpose / pad / fuse / bf16 cast).
    params, dims = prepare_params(w1, b1, ws, bs, wp, bp)

    out = belief_forward(x, params, dims)
    out = jax.block_until_ready(out)

    # Reference check in plain JAX f32 (same math as the torch module).
    h_ref = jnp.maximum(x @ w1.T + b1, 0.0)
    logits_ref = h_ref @ ws.T + bs
    logpi_ref = logits_ref - jax.scipy.special.logsumexp(logits_ref, axis=1, keepdims=True)
    prob_ref = h_ref @ wp.T + bp

    # bf16 matmul operands -> relaxed tolerance vs f32 reference.
    assert out["logpi"].shape == (batch, d) and out["true_prob"].shape == (batch, d)
    assert jnp.allclose(out["logpi"], logpi_ref, atol=5e-2, rtol=5e-2)
    assert jnp.allclose(out["true_prob"], prob_ref, atol=5e-2, rtol=5e-2)

    print("KERNEL_OK")
</pallas_src>

<mosaic_0001>
module attributes {stable_mosaic.version = 11 : i64} {
  func.func @belief_kernel(%arg0: i32, %arg1: memref<16x2xf32, #tpu.memory_space<vmem>>, %arg2: memref<2x128xbf16, #tpu.memory_space<vmem>>, %arg3: memref<1x128xf32, #tpu.memory_space<vmem>>, %arg4: memref<128x256xbf16, #tpu.memory_space<vmem>>, %arg5: memref<1x256xf32, #tpu.memory_space<vmem>>, %arg6: memref<16x128xf32, #tpu.memory_space<vmem>>, %arg7: memref<16x128xf32, #tpu.memory_space<vmem>>) attributes {dimension_semantics = [#tpu.dimension_semantics<parallel>], iteration_bounds = array<i64: 1>, scalar_prefetch = 0 : i64, scratch_operands = 0 : i64, tpu.core_type = #tpu.core_type<tc>, window_params = [{transform_indices = @transform_0, window_bounds = array<i64: 16, 2>}, {pipeline_mode = #tpu.pipeline_mode<synchronous>, transform_indices = @transform_1, window_bounds = array<i64: 2, 128>}, {pipeline_mode = #tpu.pipeline_mode<synchronous>, transform_indices = @transform_2, window_bounds = array<i64: 1, 128>}, {pipeline_mode = #tpu.pipeline_mode<synchronous>, transform_indices = @transform_3, window_bounds = array<i64: 128, 256>}, {pipeline_mode = #tpu.pipeline_mode<synchronous>, transform_indices = @transform_4, window_bounds = array<i64: 1, 256>}, {transform_indices = @transform_5, window_bounds = array<i64: 16, 128>}, {transform_indices = @transform_6, window_bounds = array<i64: 16, 128>}]} {
    %c0 = arith.constant 0 : index
    %c0_0 = arith.constant 0 : index
    %0 = vector.load %arg1[%c0, %c0_0] : memref<16x2xf32, #tpu.memory_space<vmem>>, vector<16x2xf32>
    %1 = arith.truncf %0 : vector<16x2xf32> to vector<16x2xbf16>
    %c0_1 = arith.constant 0 : index
    %c0_2 = arith.constant 0 : index
    %2 = vector.load %arg2[%c0_1, %c0_2] : memref<2x128xbf16, #tpu.memory_space<vmem>>, vector<2x128xbf16>
    %cst = arith.constant dense<0.000000e+00> : vector<16x128xf32>
    %3 = tpu.matmul %1, %2, %cst {dimension_numbers = #tpu.dot_dimension_numbers<[1], [0], [0], [1], [0, 0, 1, 1], [], []>} : vector<16x2xbf16>, vector<2x128xbf16>, vector<16x128xf32> -> vector<16x128xf32>
    %c0_3 = arith.constant 0 : index
    %c0_4 = arith.constant 0 : index
    %4 = vector.load %arg3[%c0_3, %c0_4] : memref<1x128xf32, #tpu.memory_space<vmem>>, vector<1x128xf32>
    %5 = vector.broadcast %4 : vector<1x128xf32> to vector<16x128xf32>
    %6 = arith.addf %3, %5 : vector<16x128xf32>
    %cst_5 = arith.constant 0.000000e+00 : f32
    %7 = vector.broadcast %cst_5 : f32 to vector<16x128xf32>
    %8 = arith.maximumf %6, %7 : vector<16x128xf32>
    %9 = arith.truncf %8 : vector<16x128xf32> to vector<16x128xbf16>
    %c0_6 = arith.constant 0 : index
    %c0_7 = arith.constant 0 : index
    %10 = vector.load %arg4[%c0_6, %c0_7] : memref<128x256xbf16, #tpu.memory_space<vmem>>, vector<128x256xbf16>
    %cst_8 = arith.constant dense<0.000000e+00> : vector<16x256xf32>
    %11 = tpu.matmul %9, %10, %cst_8 {dimension_numbers = #tpu.dot_dimension_numbers<[1], [0], [0], [1], [0, 0, 1, 1], [], []>} : vector<16x128xbf16>, vector<128x256xbf16>, vector<16x256xf32> -> vector<16x256xf32>
    %c0_9 = arith.constant 0 : index
    %c0_10 = arith.constant 0 : index
    %12 = vector.load %arg5[%c0_9, %c0_10] : memref<1x256xf32, #tpu.memory_space<vmem>>, vector<1x256xf32>
    %13 = vector.broadcast %12 : vector<1x256xf32> to vector<16x256xf32>
    %14 = arith.addf %11, %13 : vector<16x256xf32>
    %15 = vector.extract_strided_slice %14 {offsets = [0, 0], sizes = [16, 128], strides = [1, 1]} : vector<16x256xf32> to vector<16x128xf32>
    %cst_11 = arith.constant dense<0xFF800000> : vector<16xf32>
    %16 = vector.multi_reduction <maximumf>, %15, %cst_11 [1] : vector<16x128xf32> to vector<16xf32>
    %17 = vector.shape_cast %16 : vector<16xf32> to vector<16x1xf32>
    %18 = vector.broadcast %17 : vector<16x1xf32> to vector<16x128xf32>
    %19 = arith.subf %15, %18 : vector<16x128xf32>
    %20 = math.exp %19 : vector<16x128xf32>
    %cst_12 = arith.constant dense<0.000000e+00> : vector<16xf32>
    %21 = vector.multi_reduction <add>, %20, %cst_12 [1] : vector<16x128xf32> to vector<16xf32>
    %22 = vector.shape_cast %21 : vector<16xf32> to vector<16x1xf32>
    %23 = math.log %22 : vector<16x1xf32>
    %24 = arith.addf %17, %23 : vector<16x1xf32>
    %25 = vector.broadcast %24 : vector<16x1xf32> to vector<16x128xf32>
    %26 = arith.subf %15, %25 : vector<16x128xf32>
    %c0_13 = arith.constant 0 : index
    %c0_14 = arith.constant 0 : index
    %27 = vector.load %arg6[%c0_13, %c0_14] : memref<16x128xf32, #tpu.memory_space<vmem>>, vector<16x128xf32>
    tpu.vector_store %arg6[%c0_13, %c0_14], %26 {strides = array<i32>} : memref<16x128xf32, #tpu.memory_space<vmem>>, vector<16x128xf32>,
    %28 = vector.extract_strided_slice %14 {offsets = [0, 128], sizes = [16, 128], strides = [1, 1]} : vector<16x256xf32> to vector<16x128xf32>
    %c0_15 = arith.constant 0 : index
    %c0_16 = arith.constant 0 : index
    %29 = vector.load %arg7[%c0_15, %c0_16] : memref<16x128xf32, #tpu.memory_space<vmem>>, vector<16x128xf32>
    tpu.vector_store %arg7[%c0_15, %c0_16], %28 {strides = array<i32>} : memref<16x128xf32, #tpu.memory_space<vmem>>, vector<16x128xf32>,
    return
  }
  func.func @transform_0(%arg0: i32) -> (i32, i32) {
    %c0_i32 = arith.constant 0 : i32
    %c0_i32_0 = arith.constant 0 : i32
    return %arg0, %c0_i32 : i32, i32
  }
  func.func @transform_1(%arg0: i32) -> (i32, i32) {
    %c0_i32 = arith.constant 0 : i32
    %c0_i32_0 = arith.constant 0 : i32
    %c0_i32_1 = arith.constant 0 : i32
    return %c0_i32, %c0_i32_0 : i32, i32
  }
  func.func @transform_2(%arg0: i32) -> (i32, i32) {
    %c0_i32 = arith.constant 0 : i32
    %c0_i32_0 = arith.constant 0 : i32
    %c0_i32_1 = arith.constant 0 : i32
    return %c0_i32, %c0_i32_0 : i32, i32
  }
  func.func @transform_3(%arg0: i32) -> (i32, i32) {
    %c0_i32 = arith.constant 0 : i32
    %c0_i32_0 = arith.constant 0 : i32
    %c0_i32_1 = arith.constant 0 : i32
    return %c0_i32, %c0_i32_0 : i32, i32
  }
  func.func @transform_4(%arg0: i32) -> (i32, i32) {
    %c0_i32 = arith.constant 0 : i32
    %c0_i32_0 = arith.constant 0 : i32
    %c0_i32_1 = arith.constant 0 : i32
    return %c0_i32, %c0_i32_0 : i32, i32
  }
  func.func @transform_5(%arg0: i32) -> (i32, i32) {
    %c0_i32 = arith.constant 0 : i32
    %c0_i32_0 = arith.constant 0 : i32
    return %arg0, %c0_i32 : i32, i32
  }
  func.func @transform_6(%arg0: i32) -> (i32, i32) {
    %c0_i32 = arith.constant 0 : i32
    %c0_i32_0 = arith.constant 0 : i32
    return %arg0, %c0_i32 : i32, i32
  }
}

module attributes {stable_mosaic.version = 11 : i64} {
  func.func @belief_kernel(%arg0: i32, %arg1: memref<16x2xf32, #tpu.memory_space<vmem>>, %arg2: memref<2x128xbf16, #tpu.memory_space<vmem>>, %arg3: memref<1x128xf32, #tpu.memory_space<vmem>>, %arg4: memref<128x256xbf16, #tpu.memory_space<vmem>>, %arg5: memref<1x256xf32, #tpu.memory_space<vmem>>, %arg6: memref<16x128xf32, #tpu.memory_space<vmem>>, %arg7: memref<16x128xf32, #tpu.memory_space<vmem>>) attributes {dimension_semantics = [#tpu.dimension_semantics<parallel>], iteration_bounds = array<i64: 1>, scalar_prefetch = 0 : i64, scratch_operands = 0 : i64, tpu.core_type = #tpu.core_type<tc>, window_params = [{transform_indices = @transform_0, window_bounds = array<i64: 16, 2>}, {pipeline_mode = #tpu.pipeline_mode<synchronous>, transform_indices = @transform_1, window_bounds = array<i64: 2, 128>}, {pipeline_mode = #tpu.pipeline_mode<synchronous>, transform_indices = @transform_2, window_bounds = array<i64: 1, 128>}, {pipeline_mode = #tpu.pipeline_mode<synchronous>, transform_indices = @transform_3, window_bounds = array<i64: 128, 256>}, {pipeline_mode = #tpu.pipeline_mode<synchronous>, transform_indices = @transform_4, window_bounds = array<i64: 1, 256>}, {transform_indices = @transform_5, window_bounds = array<i64: 16, 128>}, {transform_indices = @transform_6, window_bounds = array<i64: 16, 128>}]} {
    %c0 = arith.constant 0 : index
    %c0_0 = arith.constant 0 : index
    %0 = vector.load %arg1[%c0, %c0_0] : memref<16x2xf32, #tpu.memory_space<vmem>>, vector<16x2xf32>
    %1 = arith.truncf %0 : vector<16x2xf32> to vector<16x2xbf16>
    %c0_1 = arith.constant 0 : index
    %c0_2 = arith.constant 0 : index
    %2 = vector.load %arg2[%c0_1, %c0_2] : memref<2x128xbf16, #tpu.memory_space<vmem>>, vector<2x128xbf16>
    %cst = arith.constant dense<0.000000e+00> : vector<16x128xf32>
    %3 = tpu.matmul %1, %2, %cst {dimension_numbers = #tpu.dot_dimension_numbers<[1], [0], [0], [1], [0, 0, 1, 1], [], []>} : vector<16x2xbf16>, vector<2x128xbf16>, vector<16x128xf32> -> vector<16x128xf32>
    %c0_3 = arith.constant 0 : index
    %c0_4 = arith.constant 0 : index
    %4 = vector.load %arg3[%c0_3, %c0_4] : memref<1x128xf32, #tpu.memory_space<vmem>>, vector<1x128xf32>
    %5 = vector.broadcast %4 : vector<1x128xf32> to vector<16x128xf32>
    %6 = arith.addf %3, %5 : vector<16x128xf32>
    %cst_5 = arith.constant 0.000000e+00 : f32
    %7 = vector.broadcast %cst_5 : f32 to vector<16x128xf32>
    %8 = arith.maximumf %6, %7 : vector<16x128xf32>
    %9 = arith.truncf %8 : vector<16x128xf32> to vector<16x128xbf16>
    %c0_6 = arith.constant 0 : index
    %c0_7 = arith.constant 0 : index
    %10 = vector.load %arg4[%c0_6, %c0_7] : memref<128x256xbf16, #tpu.memory_space<vmem>>, vector<128x256xbf16>
    %cst_8 = arith.constant dense<0.000000e+00> : vector<16x256xf32>
    %11 = tpu.matmul %9, %10, %cst_8 {dimension_numbers = #tpu.dot_dimension_numbers<[1], [0], [0], [1], [0, 0, 1, 1], [], []>} : vector<16x128xbf16>, vector<128x256xbf16>, vector<16x256xf32> -> vector<16x256xf32>
    %c0_9 = arith.constant 0 : index
    %c0_10 = arith.constant 0 : index
    %12 = vector.load %arg5[%c0_9, %c0_10] : memref<1x256xf32, #tpu.memory_space<vmem>>, vector<1x256xf32>
    %13 = vector.broadcast %12 : vector<1x256xf32> to vector<16x256xf32>
    %14 = arith.addf %11, %13 : vector<16x256xf32>
    %15 = vector.extract_strided_slice %14 {offsets = [0, 0], sizes = [16, 128], strides = [1, 1]} : vector<16x256xf32> to vector<16x128xf32>
    %cst_11 = arith.constant dense<0xFF800000> : vector<16xf32>
    %16 = vector.multi_reduction <maximumf>, %15, %cst_11 [1] : vector<16x128xf32> to vector<16xf32>
    %17 = vector.shape_cast %16 : vector<16xf32> to vector<16x1xf32>
    %18 = vector.broadcast %17 : vector<16x1xf32> to vector<16x128xf32>
    %19 = arith.subf %15, %18 : vector<16x128xf32>
    %20 = math.exp %19 : vector<16x128xf32>
    %cst_12 = arith.constant dense<0.000000e+00> : vector<16xf32>
    %21 = vector.multi_reduction <add>, %20, %cst_12 [1] : vector<16x128xf32> to vector<16xf32>
    %22 = vector.shape_cast %21 : vector<16xf32> to vector<16x1xf32>
    %23 = math.log %22 : vector<16x1xf32>
    %24 = arith.addf %17, %23 : vector<16x1xf32>
    %25 = vector.broadcast %24 : vector<16x1xf32> to vector<16x128xf32>
    %26 = arith.subf %15, %25 : vector<16x128xf32>
    %c0_13 = arith.constant 0 : index
    %c0_14 = arith.constant 0 : index
    %27 = vector.load %arg6[%c0_13, %c0_14] : memref<16x128xf32, #tpu.memory_space<vmem>>, vector<16x128xf32>
    tpu.vector_store %arg6[%c0_13, %c0_14], %26 {strides = array<i32>} : memref<16x128xf32, #tpu.memory_space<vmem>>, vector<16x128xf32>,
    %28 = vector.extract_strided_slice %14 {offsets = [0, 128], sizes = [16, 128], strides = [1, 1]} : vector<16x256xf32> to vector<16x128xf32>
    %c0_15 = arith.constant 0 : index
    %c0_16 = arith.constant 0 : index
    %29 = vector.load %arg7[%c0_15, %c0_16] : memref<16x128xf32, #tpu.memory_space<vmem>>, vector<16x128xf32>
    tpu.vector_store %arg7[%c0_15, %c0_16], %28 {strides = array<i32>} : memref<16x128xf32, #tpu.memory_space<vmem>>, vector<16x128xf32>,
    return
  }
  func.func @transform_0(%arg0: i32) -> (i32, i32) {
    %c0_i32 = arith.constant 0 : i32
    %c0_i32_0 = arith.constant 0 : i32
    return %arg0, %c0_i32 : i32, i32
  }
  func.func @transform_1(%arg0: i32) -> (i32, i32) {
    %c0_i32 = arith.constant 0 : i32
    %c0_i32_0 = arith.constant 0 : i32
    %c0_i32_1 = arith.constant 0 : i32
    return %c0_i32, %c0_i32_0 : i32, i32
  }
  func.func @transform_2(%arg0: i32) -> (i32, i32) {
    %c0_i32 = arith.constant 0 : i32
    %c0_i32_0 = arith.constant 0 : i32
    %c0_i32_1 = arith.constant 0 : i32
    return %c0_i32, %c0_i32_0 : i32, i32
  }
  func.func @transform_3(%arg0: i32) -> (i32, i32) {
    %c0_i32 = arith.constant 0 : i32
    %c0_i32_0 = arith.constant 0 : i32
    %c0_i32_1 = arith.constant 0 : i32
    return %c0_i32, %c0_i32_0 : i32, i32
  }
  func.func @transform_4(%arg0: i32) -> (i32, i32) {
    %c0_i32 = arith.constant 0 : i32
    %c0_i32_0 = arith.constant 0 : i32
    %c0_i32_1 = arith.constant 0 : i32
    return %c0_i32, %c0_i32_0 : i32, i32
  }
  func.func @transform_5(%arg0: i32) -> (i32, i32) {
    %c0_i32 = arith.constant 0 : i32
    %c0_i32_0 = arith.constant 0 : i32
    return %arg0, %c0_i32 : i32, i32
  }
  func.func @transform_6(%arg0: i32) -> (i32, i32) {
    %c0_i32 = arith.constant 0 : i32
    %c0_i32_0 = arith.constant 0 : i32
    return %arg0, %c0_i32 : i32, i32
  }
}

</mosaic_0001>

<llo_original>
// kernel: tpu_custom_call.1
$region0: #{tpu_custom_call.1}
  #allocation0 [shape = 'u32[]', space=smem, size = 0x4, offset = 0x4, fixed_abs, tag = 'smem constant byte address 0x4 - core index']
  #allocation1 [shape = 'u32[72,128]{1,0:T(1,128)}', space=vmem, size = 0x9000, scoped, tag = 'internal scratch']
  %s0 = inlined_call_operand.hbm [shape: f32[2,2], index: 0, kind: input, shape index: {}]
  %s1 = inlined_call_operand.hbm [shape: bf16[2,128], index: 1, kind: input, shape index: {}]
  %s2 = inlined_call_operand.vmem [shape: f32[1,128], index: 2, kind: input, shape index: {}]
  %s3 = inlined_call_operand.hbm [shape: bf16[128,256], index: 3, kind: input, shape index: {}]
  %s4 = inlined_call_operand.vmem [shape: f32[1,256], index: 4, kind: input, shape index: {}]
  %s5 = inlined_call_operand.hbm [shape: f32[2,128], index: 5, kind: output, shape index: {0}]
  %s6 = inlined_call_operand.hbm [shape: f32[2,128], index: 6, kind: output, shape index: {1}]
  %7 = xla_tuple %s5, %s6
  %s8 = sld [smem:[#allocation0]]
  $region50: #{tpu_custom_call.1} parent=0
    _
  %s10 = ssub.s32 1, %s8
  %s11 = scalar_select 0, %s10, %s8
  $region1: #{tpu_custom_call.1} parent=0
    #allocation2 [shape = 'u8[8192]{0}', space=vmem, size = 0x2000, scoped, tag = 'input window, operand 0, single buffered']
    #allocation3 [shape = 's32[1]{0}', space=sflag, size = 0x4, scoped, tag = 'scoped memory for tpu_custom_call.1']
    #allocation4 [shape = 's32[1]{0}', space=sflag, size = 0x4, scoped, tag = 'scoped memory for tpu_custom_call.1']
    #allocation5 [shape = 'u8[512]{0}', space=vmem, size = 0x400, scoped, tag = 'input window, operand 1, single buffered']
    #allocation6 [shape = 's32[1]{0}', space=sflag, size = 0x4, scoped, tag = 'scoped memory for tpu_custom_call.1']
    #allocation7 [shape = 'u8[65536]{0}', space=vmem, size = 0x10000, scoped, tag = 'input window, operand 3, single buffered']
    #allocation8 [shape = 'u8[8192]{0}', space=vmem, size = 0x2000, scoped, tag = 'output window, operand 0, single buffered']
    #allocation9 [shape = 'u8[8192]{0}', space=vmem, size = 0x2000, scoped, tag = 'output window, operand 1, single buffered']
    #allocation10 [shape = 's32[1]{0}', space=sflag, size = 0x4, scoped, tag = 'scoped memory for tpu_custom_call.1']
    %12 = vsyncpa [#allocation3], 0
    %13 = vsyncpa [#allocation6], 0
    %14 = vsyncpa [#allocation4], 0
    %15 = vsyncpa [#allocation10], 0
    // Predicated region
    $region2: #{tpu_custom_call.1} parent=1 // pred_check
      _
    $region3: #{tpu_custom_call.1} parent=1 // pred_check_branch
      %17 = sbr.rel (0) target = $region5
    $region4: #{tpu_custom_call.1} parent=1 // pred_region
      %19 = vsyncadd [#allocation3], 224
      %s20 = sshll.u32 %s0, 4
      %s21 = int_to_ptr.hbm [resolvable:$true] %s20
      %s22 = sshll.u32 [#allocation2], 4
      %s23 = int_to_ptr.vmem [resolvable:$true] %s22
      %28 = dma.hbm_to_vmem [thread:$0]  %s21, 32, %s23, [#allocation3], 32, 32, 2
    $region5: #{tpu_custom_call.1} parent=1 // pred_fallthru
      _
    // Predicated region
    $region6: #{tpu_custom_call.1} parent=1 // pred_check
      _
    $region7: #{tpu_custom_call.1} parent=1 // pred_check_branch
      %30 = sbr.rel (0) target = $region9
    $region8: #{tpu_custom_call.1} parent=1 // pred_region
      %32 = vsyncadd [#allocation6], 0
      %s34 = sshll.u32 %s1, 4
      %s35 = int_to_ptr.hbm [resolvable:$true] %s34
      %s36 = sshll.u32 [#allocation5], 4
      %s37 = int_to_ptr.vmem [resolvable:$true] %s36
      %39 = dma.hbm_to_vmem [thread:$0]  %s35, 16, %s37, [#allocation6]
    $region9: #{tpu_custom_call.1} parent=1 // pred_fallthru
      _
    // Predicated region
    $region10: #{tpu_custom_call.1} parent=1 // pred_check
      _
    $region11: #{tpu_custom_call.1} parent=1 // pred_check_branch
      %41 = sbr.rel (0) target = $region13
    $region12: #{tpu_custom_call.1} parent=1 // pred_region
      _
    $region13: #{tpu_custom_call.1} parent=1 // pred_fallthru
      _
    // Predicated region
    $region14: #{tpu_custom_call.1} parent=1 // pred_check
      _
    $region15: #{tpu_custom_call.1} parent=1 // pred_check_branch
      %43 = sbr.rel (0) target = $region17
    $region16: #{tpu_custom_call.1} parent=1 // pred_region
      %45 = vsyncadd [#allocation6], 0
      %s46 = sshll.u32 %s3, 4
      %s47 = int_to_ptr.hbm [resolvable:$true] %s46
      %s48 = sshll.u32 [#allocation7], 4
      %s49 = int_to_ptr.vmem [resolvable:$true] %s48
      %54 = dma.hbm_to_vmem [thread:$0]  %s47, 2048, %s49, [#allocation6], 128, 128, 8
    $region17: #{tpu_custom_call.1} parent=1 // pred_fallthru
      _
    // Predicated region
    $region18: #{tpu_custom_call.1} parent=1 // pred_check
      _
    $region19: #{tpu_custom_call.1} parent=1 // pred_check_branch
      %56 = sbr.rel (0) target = $region21
    $region20: #{tpu_custom_call.1} parent=1 // pred_region
      _
    $region21: #{tpu_custom_call.1} parent=1 // pred_fallthru
      _
    // Predicated region
    $region22: #{tpu_custom_call.1} parent=1 // pred_check
      _
    $region23: #{tpu_custom_call.1} parent=1 // pred_check_branch
      %58 = sbr.rel (0) target = $region25
    $region24: #{tpu_custom_call.1} parent=1 // pred_region
      %60 = dma.done [#allocation3], 256
    $region25: #{tpu_custom_call.1} parent=1 // pred_fallthru
      _
    // Predicated region
    $region26: #{tpu_custom_call.1} parent=1 // pred_check
      _
    $region27: #{tpu_custom_call.1} parent=1 // pred_check_branch
      %62 = sbr.rel (0) target = $region29
    $region28: #{tpu_custom_call.1} parent=1 // pred_region
      %64 = dma.done [#allocation6], 16
    $region29: #{tpu_custom_call.1} parent=1 // pred_fallthru
      _
    // Predicated region
    $region30: #{tpu_custom_call.1} parent=1 // pred_check
      _
    $region31: #{tpu_custom_call.1} parent=1 // pred_check_branch
      %66 = sbr.rel (0) target = $region33
    $region32: #{tpu_custom_call.1} parent=1 // pred_region
      %68 = dma.done [#allocation6], 2048
    $region33: #{tpu_custom_call.1} parent=1 // pred_fallthru
      _
    %v70 = vld [vmem:[#allocation2] sm:$0xff]
    %v71 = vld [vmem:[#allocation2 + $0x8] sm:$0xff]
    %v72 = vpack.c.bf16 %v71, %v70
    %v73 = vld [vmem:[#allocation5] sm:$0x1]
    %v74 = vld [vmem:[%s2] sm:$0x1]
    %v76 = vperm.slane %v74, 0
    %vm78 = vcmask 15360
    %v80 = vsel %vm78, %v72, 0
    %vm82 = vcmask 1040384
    %v84 = vsel %vm82, %v73, 0
    %86 = vmatpush.bf16.msra.mxu0 0
    %87 = vmatpush.bf16.msra.mxu0 0
    %88 = vmatpush.bf16.msra.mxu0 0
    %89 = vmatpush.bf16.msra.mxu0 0
    %90 = vmatpush.bf16.msra.mxu0 0
    %91 = vmatpush.bf16.msra.mxu0 0
    %92 = vmatpush.bf16.msra.mxu0 0
    %93 = vmatpush.bf16.msra.mxu0 %v84
    %94 = vmatmul.bf16.gmra.mxu0 %v80
    %v95 = vpop.f32.mrf.mxu0
    %v96 = vadd.f32 %v76, %v95
    %v97 = vpop.f32.mrf.mxu0
    %v98 = vadd.f32 %v76, %v97
    %99 = vdwg.mxu0
    %v100 = vmax.f32 %v96, 0.0
    %v101 = vmax.f32 %v98, 0.0
    %v102 = vpack.c.bf16 %v101, %v100
    %v103 = vld [vmem:[#allocation7] sm:$0xff]
    %v104 = vld [vmem:[#allocation7 + $0x8] sm:$0xff]
    %v105 = vld [vmem:[#allocation7 + $0x10] sm:$0xff]
    %v106 = vld [vmem:[#allocation7 + $0x18] sm:$0xff]
    %v107 = vld [vmem:[#allocation7 + $0x20] sm:$0xff]
    %v108 = vld [vmem:[#allocation7 + $0x28] sm:$0xff]
    %v109 = vld [vmem:[#allocation7 + $0x30] sm:$0xff]
    %v110 = vld [vmem:[#allocation7 + $0x38] sm:$0xff]
    %v111 = vld [vmem:[#allocation7 + $0x40] sm:$0xff]
    %v112 = vld [vmem:[#allocation7 + $0x48] sm:$0xff]
    %v113 = vld [vmem:[#allocation7 + $0x50] sm:$0xff]
    %v114 = vld [vmem:[#allocation7 + $0x58] sm:$0xff]
    %v115 = vld [vmem:[#allocation7 + $0x60] sm:$0xff]
    %v116 = vld [vmem:[#allocation7 + $0x68] sm:$0xff]
    %v117 = vld [vmem:[#allocation7 + $0x70] sm:$0xff]
    %v118 = vld [vmem:[#allocation7 + $0x78] sm:$0xff]
    %v119 = vld [vmem:[%s4] sm:$0x3]
    %v121 = vperm.slane %v119, 0
    %v122 = vperm.slane %v119, 1
    %v141 = vunpack.c.l.b16 %v103
    %v142 = vunpack.c.h.b16 %v103
    %v143 = vunpack.c.l.b16 %v104
    %v144 = vunpack.c.h.b16 %v104
    %v145 = vunpack.c.l.b16 %v105
    %v146 = vunpack.c.h.b16 %v105
    %v147 = vunpack.c.l.b16 %v106
    %v148 = vunpack.c.h.b16 %v106
    %v149 = vunpack.c.l.b16 %v107
    %v150 = vunpack.c.h.b16 %v107
    %v151 = vunpack.c.l.b16 %v108
    %v152 = vunpack.c.h.b16 %v108
    %v153 = vunpack.c.l.b16 %v109
    %v154 = vunpack.c.h.b16 %v109
    %v155 = vunpack.c.l.b16 %v110
    %v156 = vunpack.c.h.b16 %v110
    %v157 = vunpack.c.l.b16 %v111
    %v158 = vunpack.c.h.b16 %v111
    %v159 = vunpack.c.l.b16 %v112
    %v160 = vunpack.c.h.b16 %v112
    %v161 = vunpack.c.l.b16 %v113
    %v162 = vunpack.c.h.b16 %v113
    %v163 = vunpack.c.l.b16 %v114
    %v164 = vunpack.c.h.b16 %v114
    %v165 = vunpack.c.l.b16 %v115
    %v166 = vunpack.c.h.b16 %v115
    %v167 = vunpack.c.l.b16 %v116
    %v168 = vunpack.c.h.b16 %v116
    %v169 = vunpack.c.l.b16 %v117
    %v170 = vunpack.c.h.b16 %v117
    %v171 = vunpack.c.l.b16 %v118
    %v172 = vunpack.c.h.b16 %v118
    %v173 = vpack.c.b16 %v143, %v141
    %v174 = vpack.c.b16 %v144, %v142
    %v175 = vpack.c.b16 %v147, %v145
    %v176 = vpack.c.b16 %v148, %v146
    %v177 = vpack.c.b16 %v151, %v149
    %v178 = vpack.c.b16 %v152, %v150
    %v179 = vpack.c.b16 %v155, %v153
    %v180 = vpack.c.b16 %v156, %v154
    %v181 = vpack.c.b16 %v159, %v157
    %v182 = vpack.c.b16 %v160, %v158
    %v183 = vpack.c.b16 %v163, %v161
    %v184 = vpack.c.b16 %v164, %v162
    %v185 = vpack.c.b16 %v167, %v165
    %v186 = vpack.c.b16 %v168, %v166
    %v187 = vpack.c.b16 %v171, %v169
    %v188 = vpack.c.b16 %v172, %v170
    %205 = vmatpush.bf16.msra.mxu0 %v187
    %206 = vmatpush.bf16.msra.mxu0 %v185
    %207 = vmatpush.bf16.msra.mxu0 %v183
    %208 = vmatpush.bf16.msra.mxu0 %v181
    %209 = vmatpush.bf16.msra.mxu0 %v179
    %210 = vmatpush.bf16.msra.mxu0 %v177
    %211 = vmatpush.bf16.msra.mxu0 %v175
    %212 = vmatpush.bf16.msra.mxu0 %v173
    %213 = vmatmul.bf16.gmra.mxu0 %v102
    %v214 = vpop.f32.mrf.mxu0
    %v215 = vadd.f32 %v121, %v214
    %v216 = vpop.f32.mrf.mxu0
    %v217 = vadd.f32 %v121, %v216
    %218 = vdwg.mxu0
    %219 = vmatpush.bf16.msra.mxu0 %v188
    %220 = vmatpush.bf16.msra.mxu0 %v186
    %221 = vmatpush.bf16.msra.mxu0 %v184
    %222 = vmatpush.bf16.msra.mxu0 %v182
    %223 = vmatpush.bf16.msra.mxu0 %v180
    %224 = vmatpush.bf16.msra.mxu0 %v178
    %225 = vmatpush.bf16.msra.mxu0 %v176
    %226 = vmatpush.bf16.msra.mxu0 %v174
    %227 = vmatmul.bf16.gmra.mxu0 %v102
    %v228 = vpop.f32.mrf.mxu0
    %v229 = vadd.f32 %v122, %v228
    %v230 = vpop.f32.mrf.mxu0
    %v231 = vadd.f32 %v122, %v230
    %232 = vdwg.mxu0
    %233 = vmax.xlane.f32.xlu0 %v215
    %v234 = vpop.xlane.xlu0 %233
    %235 = vmax.xlane.f32.xlu0 %v217
    %v236 = vpop.xlane.xlu0 %235
    %v237 = vsub.f32 %v215, %v234
    %v238 = vsub.f32 %v217, %v236
    %v239 = vmul.f32 %v237, 1.442695
    %v240 = vpow.pop %v239
    %v241 = vmul.f32 %v238, 1.442695
    %v242 = vpow.pop %v241
    %243 = vadd.xlane.f32.xlu0 %v240
    %v244 = vpop.xlane.xlu0 %243
    %245 = vadd.xlane.f32.xlu0 %v242
    %v246 = vpop.xlane.xlu0 %245
    %v247 = vlog2.pop %v244
    %v248 = vmul.f32 %v247, 0.6931472
    %v249 = vlog2.pop %v246
    %v250 = vmul.f32 %v249, 0.6931472
    %v251 = vadd.f32 %v234, %v248
    %v252 = vadd.f32 %v236, %v250
    %v253 = vsub.f32 %v215, %v251
    %v254 = vsub.f32 %v217, %v252
    %255 = vst [vmem:[#allocation8] sm:$0xff] %v253
    %256 = vst [vmem:[#allocation8 + $0x8] sm:$0xff] %v254
    %257 = vst [vmem:[#allocation9] sm:$0xff] %v229
    %258 = vst [vmem:[#allocation9 + $0x8] sm:$0xff] %v231
    // Predicated region
    $region34: #{tpu_custom_call.1} parent=1 // pred_check
      _
    $region35: #{tpu_custom_call.1} parent=1 // pred_check_branch
      %260 = sbr.rel (0) target = $region37
    $region36: #{tpu_custom_call.1} parent=1 // pred_region
      %262 = vsyncadd [#allocation4], 224
      %s263 = sshll.u32 [#allocation8], 4
      %s264 = int_to_ptr.vmem [resolvable:$true] %s263
      %s265 = sshll.u32 %s5, 4
      %s266 = int_to_ptr.hbm [resolvable:$true] %s265
      %271 = dma.vmem_to_hbm [thread:$0]  %s264, 32, %s266, [#allocation4], 32, 32, 2
    $region37: #{tpu_custom_call.1} parent=1 // pred_fallthru
      _
    // Predicated region
    $region38: #{tpu_custom_call.1} parent=1 // pred_check
      _
    $region39: #{tpu_custom_call.1} parent=1 // pred_check_branch
      %273 = sbr.rel (0) target = $region41
    $region40: #{tpu_custom_call.1} parent=1 // pred_region
      %275 = vsyncadd [#allocation10], 224
      %s276 = sshll.u32 [#allocation9], 4
      %s277 = int_to_ptr.vmem [resolvable:$true] %s276
      %s278 = sshll.u32 %s6, 4
      %s279 = int_to_ptr.hbm [resolvable:$true] %s278
      %284 = dma.vmem_to_hbm [thread:$0]  %s277, 32, %s279, [#allocation10], 32, 32, 2
    $region41: #{tpu_custom_call.1} parent=1 // pred_fallthru
      _
    // Predicated region
    $region42: #{tpu_custom_call.1} parent=1 // pred_check
      _
    $region43: #{tpu_custom_call.1} parent=1 // pred_check_branch
      %286 = sbr.rel (0) target = $region45
    $region44: #{tpu_custom_call.1} parent=1 // pred_region
      %288 = dma.done [#allocation4], 256
    $region45: #{tpu_custom_call.1} parent=1 // pred_fallthru
      _
    // Predicated region
    $region46: #{tpu_custom_call.1} parent=1 // pred_check
      _
    $region47: #{tpu_custom_call.1} parent=1 // pred_check_branch
      %290 = sbr.rel (0) target = $region49
    $region48: #{tpu_custom_call.1} parent=1 // pred_region
      %292 = dma.done [#allocation10], 256
    $region49: #{tpu_custom_call.1} parent=1 // pred_fallthru
      _
    %293 = vsyncpa [#allocation3], 1
    %294 = vsyncpa [#allocation6], 1
    %295 = vsyncpa [#allocation4], 1
    %296 = vsyncpa [#allocation10], 1

// kernel: tpu_custom_call.1
$region0: #{tpu_custom_call.1}
  #allocation0 [shape = 'u32[]', space=smem, size = 0x4, offset = 0x4, fixed_abs, tag = 'smem constant byte address 0x4 - core index']
  #allocation1 [shape = 'u32[72,128]{1,0:T(1,128)}', space=vmem, size = 0x9000, scoped, tag = 'internal scratch']
  %s0 = inlined_call_operand.hbm [shape: f32[2,2], index: 0, kind: input, shape index: {}]
  %s1 = inlined_call_operand.hbm [shape: bf16[2,128], index: 1, kind: input, shape index: {}]
  %s2 = inlined_call_operand.vmem [shape: f32[1,128], index: 2, kind: input, shape index: {}]
  %s3 = inlined_call_operand.hbm [shape: bf16[128,256], index: 3, kind: input, shape index: {}]
  %s4 = inlined_call_operand.vmem [shape: f32[1,256], index: 4, kind: input, shape index: {}]
  %s5 = inlined_call_operand.hbm [shape: f32[2,128], index: 5, kind: output, shape index: {0}]
  %s6 = inlined_call_operand.hbm [shape: f32[2,128], index: 6, kind: output, shape index: {1}]
  %7 = xla_tuple %s5, %s6
  %s8 = sld [smem:[#allocation0]]
  $region50: #{tpu_custom_call.1} parent=0
    _
  %s10 = ssub.s32 1, %s8
  %s11 = scalar_select 0, %s10, %s8
  $region1: #{tpu_custom_call.1} parent=0
    #allocation2 [shape = 'u8[8192]{0}', space=vmem, size = 0x2000, scoped, tag = 'input window, operand 0, single buffered']
    #allocation3 [shape = 's32[1]{0}', space=sflag, size = 0x4, scoped, tag = 'scoped memory for tpu_custom_call.1']
    #allocation4 [shape = 's32[1]{0}', space=sflag, size = 0x4, scoped, tag = 'scoped memory for tpu_custom_call.1']
    #allocation5 [shape = 'u8[512]{0}', space=vmem, size = 0x400, scoped, tag = 'input window, operand 1, single buffered']
    #allocation6 [shape = 's32[1]{0}', space=sflag, size = 0x4, scoped, tag = 'scoped memory for tpu_custom_call.1']
    #allocation7 [shape = 'u8[65536]{0}', space=vmem, size = 0x10000, scoped, tag = 'input window, operand 3, single buffered']
    #allocation8 [shape = 'u8[8192]{0}', space=vmem, size = 0x2000, scoped, tag = 'output window, operand 0, single buffered']
    #allocation9 [shape = 'u8[8192]{0}', space=vmem, size = 0x2000, scoped, tag = 'output window, operand 1, single buffered']
    #allocation10 [shape = 's32[1]{0}', space=sflag, size = 0x4, scoped, tag = 'scoped memory for tpu_custom_call.1']
    %12 = vsyncpa [#allocation3], 0
    %13 = vsyncpa [#allocation6], 0
    %14 = vsyncpa [#allocation4], 0
    %15 = vsyncpa [#allocation10], 0
    // Predicated region
    $region2: #{tpu_custom_call.1} parent=1 // pred_check
      _
    $region3: #{tpu_custom_call.1} parent=1 // pred_check_branch
      %17 = sbr.rel (0) target = $region5
    $region4: #{tpu_custom_call.1} parent=1 // pred_region
      %19 = vsyncadd [#allocation3], 224
      %s20 = sshll.u32 %s0, 4
      %s21 = int_to_ptr.hbm [resolvable:$true] %s20
      %s22 = sshll.u32 [#allocation2], 4
      %s23 = int_to_ptr.vmem [resolvable:$true] %s22
      %28 = dma.hbm_to_vmem [thread:$0]  %s21, 32, %s23, [#allocation3], 32, 32, 2
    $region5: #{tpu_custom_call.1} parent=1 // pred_fallthru
      _
    // Predicated region
    $region6: #{tpu_custom_call.1} parent=1 // pred_check
      _
    $region7: #{tpu_custom_call.1} parent=1 // pred_check_branch
      %30 = sbr.rel (0) target = $region9
    $region8: #{tpu_custom_call.1} parent=1 // pred_region
      %32 = vsyncadd [#allocation6], 0
      %s34 = sshll.u32 %s1, 4
      %s35 = int_to_ptr.hbm [resolvable:$true] %s34
      %s36 = sshll.u32 [#allocation5], 4
      %s37 = int_to_ptr.vmem [resolvable:$true] %s36
      %39 = dma.hbm_to_vmem [thread:$0]  %s35, 16, %s37, [#allocation6]
    $region9: #{tpu_custom_call.1} parent=1 // pred_fallthru
      _
    // Predicated region
    $region10: #{tpu_custom_call.1} parent=1 // pred_check
      _
    $region11: #{tpu_custom_call.1} parent=1 // pred_check_branch
      %41 = sbr.rel (0) target = $region13
    $region12: #{tpu_custom_call.1} parent=1 // pred_region
      _
    $region13: #{tpu_custom_call.1} parent=1 // pred_fallthru
      _
    // Predicated region
    $region14: #{tpu_custom_call.1} parent=1 // pred_check
      _
    $region15: #{tpu_custom_call.1} parent=1 // pred_check_branch
      %43 = sbr.rel (0) target = $region17
    $region16: #{tpu_custom_call.1} parent=1 // pred_region
      %45 = vsyncadd [#allocation6], 0
      %s46 = sshll.u32 %s3, 4
      %s47 = int_to_ptr.hbm [resolvable:$true] %s46
      %s48 = sshll.u32 [#allocation7], 4
      %s49 = int_to_ptr.vmem [resolvable:$true] %s48
      %54 = dma.hbm_to_vmem [thread:$0]  %s47, 2048, %s49, [#allocation6], 128, 128, 8
    $region17: #{tpu_custom_call.1} parent=1 // pred_fallthru
      _
    // Predicated region
    $region18: #{tpu_custom_call.1} parent=1 // pred_check
      _
    $region19: #{tpu_custom_call.1} parent=1 // pred_check_branch
      %56 = sbr.rel (0) target = $region21
    $region20: #{tpu_custom_call.1} parent=1 // pred_region
      _
    $region21: #{tpu_custom_call.1} parent=1 // pred_fallthru
      _
    // Predicated region
    $region22: #{tpu_custom_call.1} parent=1 // pred_check
      _
    $region23: #{tpu_custom_call.1} parent=1 // pred_check_branch
      %58 = sbr.rel (0) target = $region25
    $region24: #{tpu_custom_call.1} parent=1 // pred_region
      %60 = dma.done [#allocation3], 256
    $region25: #{tpu_custom_call.1} parent=1 // pred_fallthru
      _
    // Predicated region
    $region26: #{tpu_custom_call.1} parent=1 // pred_check
      _
    $region27: #{tpu_custom_call.1} parent=1 // pred_check_branch
      %62 = sbr.rel (0) target = $region29
    $region28: #{tpu_custom_call.1} parent=1 // pred_region
      %64 = dma.done [#allocation6], 16
    $region29: #{tpu_custom_call.1} parent=1 // pred_fallthru
      _
    // Predicated region
    $region30: #{tpu_custom_call.1} parent=1 // pred_check
      _
    $region31: #{tpu_custom_call.1} parent=1 // pred_check_branch
      %66 = sbr.rel (0) target = $region33
    $region32: #{tpu_custom_call.1} parent=1 // pred_region
      %68 = dma.done [#allocation6], 2048
    $region33: #{tpu_custom_call.1} parent=1 // pred_fallthru
      _
    %v70 = vld [vmem:[#allocation2] sm:$0xff]
    %v71 = vld [vmem:[#allocation2 + $0x8] sm:$0xff]
    %v72 = vpack.c.bf16 %v71, %v70
    %v73 = vld [vmem:[#allocation5] sm:$0x1]
    %v74 = vld [vmem:[%s2] sm:$0x1]
    %v76 = vperm.slane %v74, 0
    %vm78 = vcmask 15360
    %v80 = vsel %vm78, %v72, 0
    %vm82 = vcmask 1040384
    %v84 = vsel %vm82, %v73, 0
    %86 = vmatpush.bf16.msra.mxu0 0
    %87 = vmatpush.bf16.msra.mxu0 0
    %88 = vmatpush.bf16.msra.mxu0 0
    %89 = vmatpush.bf16.msra.mxu0 0
    %90 = vmatpush.bf16.msra.mxu0 0
    %91 = vmatpush.bf16.msra.mxu0 0
    %92 = vmatpush.bf16.msra.mxu0 0
    %93 = vmatpush.bf16.msra.mxu0 %v84
    %94 = vmatmul.bf16.gmra.mxu0 %v80
    %v95 = vpop.f32.mrf.mxu0
    %v96 = vadd.f32 %v76, %v95
    %v97 = vpop.f32.mrf.mxu0
    %v98 = vadd.f32 %v76, %v97
    %99 = vdwg.mxu0
    %v100 = vmax.f32 %v96, 0.0
    %v101 = vmax.f32 %v98, 0.0
    %v102 = vpack.c.bf16 %v101, %v100
    %v103 = vld [vmem:[#allocation7] sm:$0xff]
    %v104 = vld [vmem:[#allocation7 + $0x8] sm:$0xff]
    %v105 = vld [vmem:[#allocation7 + $0x10] sm:$0xff]
    %v106 = vld [vmem:[#allocation7 + $0x18] sm:$0xff]
    %v107 = vld [vmem:[#allocation7 + $0x20] sm:$0xff]
    %v108 = vld [vmem:[#allocation7 + $0x28] sm:$0xff]
    %v109 = vld [vmem:[#allocation7 + $0x30] sm:$0xff]
    %v110 = vld [vmem:[#allocation7 + $0x38] sm:$0xff]
    %v111 = vld [vmem:[#allocation7 + $0x40] sm:$0xff]
    %v112 = vld [vmem:[#allocation7 + $0x48] sm:$0xff]
    %v113 = vld [vmem:[#allocation7 + $0x50] sm:$0xff]
    %v114 = vld [vmem:[#allocation7 + $0x58] sm:$0xff]
    %v115 = vld [vmem:[#allocation7 + $0x60] sm:$0xff]
    %v116 = vld [vmem:[#allocation7 + $0x68] sm:$0xff]
    %v117 = vld [vmem:[#allocation7 + $0x70] sm:$0xff]
    %v118 = vld [vmem:[#allocation7 + $0x78] sm:$0xff]
    %v119 = vld [vmem:[%s4] sm:$0x3]
    %v121 = vperm.slane %v119, 0
    %v122 = vperm.slane %v119, 1
    %v141 = vunpack.c.l.b16 %v103
    %v142 = vunpack.c.h.b16 %v103
    %v143 = vunpack.c.l.b16 %v104
    %v144 = vunpack.c.h.b16 %v104
    %v145 = vunpack.c.l.b16 %v105
    %v146 = vunpack.c.h.b16 %v105
    %v147 = vunpack.c.l.b16 %v106
    %v148 = vunpack.c.h.b16 %v106
    %v149 = vunpack.c.l.b16 %v107
    %v150 = vunpack.c.h.b16 %v107
    %v151 = vunpack.c.l.b16 %v108
    %v152 = vunpack.c.h.b16 %v108
    %v153 = vunpack.c.l.b16 %v109
    %v154 = vunpack.c.h.b16 %v109
    %v155 = vunpack.c.l.b16 %v110
    %v156 = vunpack.c.h.b16 %v110
    %v157 = vunpack.c.l.b16 %v111
    %v158 = vunpack.c.h.b16 %v111
    %v159 = vunpack.c.l.b16 %v112
    %v160 = vunpack.c.h.b16 %v112
    %v161 = vunpack.c.l.b16 %v113
    %v162 = vunpack.c.h.b16 %v113
    %v163 = vunpack.c.l.b16 %v114
    %v164 = vunpack.c.h.b16 %v114
    %v165 = vunpack.c.l.b16 %v115
    %v166 = vunpack.c.h.b16 %v115
    %v167 = vunpack.c.l.b16 %v116
    %v168 = vunpack.c.h.b16 %v116
    %v169 = vunpack.c.l.b16 %v117
    %v170 = vunpack.c.h.b16 %v117
    %v171 = vunpack.c.l.b16 %v118
    %v172 = vunpack.c.h.b16 %v118
    %v173 = vpack.c.b16 %v143, %v141
    %v174 = vpack.c.b16 %v144, %v142
    %v175 = vpack.c.b16 %v147, %v145
    %v176 = vpack.c.b16 %v148, %v146
    %v177 = vpack.c.b16 %v151, %v149
    %v178 = vpack.c.b16 %v152, %v150
    %v179 = vpack.c.b16 %v155, %v153
    %v180 = vpack.c.b16 %v156, %v154
    %v181 = vpack.c.b16 %v159, %v157
    %v182 = vpack.c.b16 %v160, %v158
    %v183 = vpack.c.b16 %v163, %v161
    %v184 = vpack.c.b16 %v164, %v162
    %v185 = vpack.c.b16 %v167, %v165
    %v186 = vpack.c.b16 %v168, %v166
    %v187 = vpack.c.b16 %v171, %v169
    %v188 = vpack.c.b16 %v172, %v170
    %205 = vmatpush.bf16.msra.mxu0 %v187
    %206 = vmatpush.bf16.msra.mxu0 %v185
    %207 = vmatpush.bf16.msra.mxu0 %v183
    %208 = vmatpush.bf16.msra.mxu0 %v181
    %209 = vmatpush.bf16.msra.mxu0 %v179
    %210 = vmatpush.bf16.msra.mxu0 %v177
    %211 = vmatpush.bf16.msra.mxu0 %v175
    %212 = vmatpush.bf16.msra.mxu0 %v173
    %213 = vmatmul.bf16.gmra.mxu0 %v102
    %v214 = vpop.f32.mrf.mxu0
    %v215 = vadd.f32 %v121, %v214
    %v216 = vpop.f32.mrf.mxu0
    %v217 = vadd.f32 %v121, %v216
    %218 = vdwg.mxu0
    %219 = vmatpush.bf16.msra.mxu0 %v188
    %220 = vmatpush.bf16.msra.mxu0 %v186
    %221 = vmatpush.bf16.msra.mxu0 %v184
    %222 = vmatpush.bf16.msra.mxu0 %v182
    %223 = vmatpush.bf16.msra.mxu0 %v180
    %224 = vmatpush.bf16.msra.mxu0 %v178
    %225 = vmatpush.bf16.msra.mxu0 %v176
    %226 = vmatpush.bf16.msra.mxu0 %v174
    %227 = vmatmul.bf16.gmra.mxu0 %v102
    %v228 = vpop.f32.mrf.mxu0
    %v229 = vadd.f32 %v122, %v228
    %v230 = vpop.f32.mrf.mxu0
    %v231 = vadd.f32 %v122, %v230
    %232 = vdwg.mxu0
    %233 = vmax.xlane.f32.xlu0 %v215
    %v234 = vpop.xlane.xlu0 %233
    %235 = vmax.xlane.f32.xlu0 %v217
    %v236 = vpop.xlane.xlu0 %235
    %v237 = vsub.f32 %v215, %v234
    %v238 = vsub.f32 %v217, %v236
    %v239 = vmul.f32 %v237, 1.442695
    %v240 = vpow.pop %v239
    %v241 = vmul.f32 %v238, 1.442695
    %v242 = vpow.pop %v241
    %243 = vadd.xlane.f32.xlu0 %v240
    %v244 = vpop.xlane.xlu0 %243
    %245 = vadd.xlane.f32.xlu0 %v242
    %v246 = vpop.xlane.xlu0 %245
    %v247 = vlog2.pop %v244
    %v248 = vmul.f32 %v247, 0.6931472
    %v249 = vlog2.pop %v246
    %v250 = vmul.f32 %v249, 0.6931472
    %v251 = vadd.f32 %v234, %v248
    %v252 = vadd.f32 %v236, %v250
    %v253 = vsub.f32 %v215, %v251
    %v254 = vsub.f32 %v217, %v252
    %255 = vst [vmem:[#allocation8] sm:$0xff] %v253
    %256 = vst [vmem:[#allocation8 + $0x8] sm:$0xff] %v254
    %257 = vst [vmem:[#allocation9] sm:$0xff] %v229
    %258 = vst [vmem:[#allocation9 + $0x8] sm:$0xff] %v231
    // Predicated region
    $region34: #{tpu_custom_call.1} parent=1 // pred_check
      _
    $region35: #{tpu_custom_call.1} parent=1 // pred_check_branch
      %260 = sbr.rel (0) target = $region37
    $region36: #{tpu_custom_call.1} parent=1 // pred_region
      %262 = vsyncadd [#allocation4], 224
      %s263 = sshll.u32 [#allocation8], 4
      %s264 = int_to_ptr.vmem [resolvable:$true] %s263
      %s265 = sshll.u32 %s5, 4
      %s266 = int_to_ptr.hbm [resolvable:$true] %s265
      %271 = dma.vmem_to_hbm [thread:$0]  %s264, 32, %s266, [#allocation4], 32, 32, 2
    $region37: #{tpu_custom_call.1} parent=1 // pred_fallthru
      _
    // Predicated region
    $region38: #{tpu_custom_call.1} parent=1 // pred_check
      _
    $region39: #{tpu_custom_call.1} parent=1 // pred_check_branch
      %273 = sbr.rel (0) target = $region41
    $region40: #{tpu_custom_call.1} parent=1 // pred_region
      %275 = vsyncadd [#allocation10], 224
      %s276 = sshll.u32 [#allocation9], 4
      %s277 = int_to_ptr.vmem [resolvable:$true] %s276
      %s278 = sshll.u32 %s6, 4
      %s279 = int_to_ptr.hbm [resolvable:$true] %s278
      %284 = dma.vmem_to_hbm [thread:$0]  %s277, 32, %s279, [#allocation10], 32, 32, 2
    $region41: #{tpu_custom_call.1} parent=1 // pred_fallthru
      _
    // Predicated region
    $region42: #{tpu_custom_call.1} parent=1 // pred_check
      _
    $region43: #{tpu_custom_call.1} parent=1 // pred_check_branch
      %286 = sbr.rel (0) target = $region45
    $region44: #{tpu_custom_call.1} parent=1 // pred_region
      %288 = dma.done [#allocation4], 256
    $region45: #{tpu_custom_call.1} parent=1 // pred_fallthru
      _
    // Predicated region
    $region46: #{tpu_custom_call.1} parent=1 // pred_check
      _
    $region47: #{tpu_custom_call.1} parent=1 // pred_check_branch
      %290 = sbr.rel (0) target = $region49
    $region48: #{tpu_custom_call.1} parent=1 // pred_region
      %292 = dma.done [#allocation10], 256
    $region49: #{tpu_custom_call.1} parent=1 // pred_fallthru
      _
    %293 = vsyncpa [#allocation3], 1
    %294 = vsyncpa [#allocation6], 1
    %295 = vsyncpa [#allocation4], 1
    %296 = vsyncpa [#allocation10], 1

</llo_original>
